<compile_context>
chip_gen: v7x
topology: tpu7x:2x2x1
jax: 0.10.0
libtpu: 0.0.40
codegen_flags: <defaults>
</compile_context>

<pallas_src>
import functools

import jax
import jax.numpy as jnp
from jax.experimental import pallas as pl
from jax.experimental.pallas import tpu as pltpu


def _round_up(x, m):
    return (x + m - 1) // m * m


def net_dgm_kernel(tx_ref, w_x_ref, b_x_ref, w_zgr_s_ref, w_h_s_ref,
                   w_out_ref, b_out_ref, out_ref):
    f32, bf16 = jnp.float32, jnp.bfloat16
    dim_S = w_h_s_ref.shape[-1]

    tx = tx_ref[...]                                          # (TB, din) f32

    # Hoisted tx-side projections: 3 layers x {Z,G,R,H} + input layer in a
    # single lane-dense MXU pass, biases folded in.
    # Column layout: [l0: Z|G|R|H][l1: Z|G|R|H][l2: Z|G|R|H][input]
    txp = jnp.dot(tx.astype(bf16), w_x_ref[...],
                  preferred_element_type=f32) + b_x_ref[...]  # (TB, 13*dim_S)

    # input_layer: Tanh(Linear(tx))
    S = jnp.tanh(txp[:, 12 * dim_S:13 * dim_S])               # (TB, dim_S)

    # 3 DGM layers, statically unrolled; 2 recurrent matmuls per layer.
    for l in range(3):
        base = 4 * dim_S * l
        p_zgr = txp[:, base:base + 3 * dim_S]
        p_h = txp[:, base + 3 * dim_S:base + 4 * dim_S]

        zgr = jnp.tanh(p_zgr + jnp.dot(S.astype(bf16), w_zgr_s_ref[l],
                                       preferred_element_type=f32))
        Z = zgr[:, 0 * dim_S:1 * dim_S]
        G = zgr[:, 1 * dim_S:2 * dim_S]
        R = zgr[:, 2 * dim_S:3 * dim_S]

        H = jnp.tanh(p_h + jnp.dot((S * R).astype(bf16), w_h_s_ref[l],
                                   preferred_element_type=f32))
        S = (1.0 - G) * H + Z * S

    # output_layer: Linear(dim_S, 1). An N=1 MXU matmul wastes a full pass, so
    # use a VPU multiply + XLU lane reduction instead.
    out_ref[...] = (jnp.sum(S * w_out_ref[...], axis=-1, keepdims=True)
                    + b_out_ref[...])


def init_params(key, dim_x, dim_S):
    """PyTorch nn.Linear-style init (uniform +/- 1/sqrt(fan_in)), f32, natural layout."""
    keys = iter(jax.random.split(key, 64))

    def lin(nin, nout):
        bound = 1.0 / (nin ** 0.5)
        w = jax.random.uniform(next(keys), (nin, nout), jnp.float32, -bound, bound)
        b = jax.random.uniform(next(keys), (nout,), jnp.float32, -bound, bound)
        return w, b

    din = dim_x + 1            # tx feature size
    dcat = din + dim_S         # cat([tx, S]) feature size

    p = {}
    w, b = lin(din, dim_S)
    p["w_in"], p["b_in"] = w, b[None, :]

    for gate in ("z", "g", "r", "h"):
        wx, ws, bb = [], [], []
        for _ in range(3):     # 3 DGM layers
            w, b = lin(dcat, dim_S)
            wx.append(w[:din])     # cat([tx, S]) @ W == tx @ W[:din] + S @ W[din:]
            ws.append(w[din:])
            bb.append(b[None, :])
        p[f"w{gate}_x"] = jnp.stack(wx)   # (3, din, dim_S)
        p[f"w{gate}_s"] = jnp.stack(ws)   # (3, dim_S, dim_S)
        p[f"b{gate}"] = jnp.stack(bb)     # (3, 1, dim_S)

    w, b = lin(dim_S, 1)
    p["w_out"], p["b_out"] = w, b[None, :]
    return p


def pack_params(p, dim_x, dim_S):
    """Pack natural params into the fused, lane-dense kernel layout (bf16 matmul weights)."""
    bf16 = jnp.bfloat16
    wx_cols, bx_cols = [], []
    for l in range(3):
        for g in ("z", "g", "r", "h"):
            wx_cols.append(p[f"w{g}_x"][l])
            bx_cols.append(p[f"b{g}"][l])
    wx_cols.append(p["w_in"])
    bx_cols.append(p["b_in"])

    return {
        "w_x": jnp.concatenate(wx_cols, axis=1).astype(bf16),      # (din, 13*dim_S)
        "b_x": jnp.concatenate(bx_cols, axis=1),                   # (1, 13*dim_S) f32
        "w_zgr_s": jnp.stack([
            jnp.concatenate([p["wz_s"][l], p["wg_s"][l], p["wr_s"][l]], axis=1)
            for l in range(3)]).astype(bf16),                      # (3, dim_S, 3*dim_S)
        "w_h_s": p["wh_s"].astype(bf16),                           # (3, dim_S, dim_S)
        "w_out_row": p["w_out"].T,                                 # (1, dim_S) f32
        "b_out": p["b_out"],                                       # (1, 1) f32
    }


@functools.partial(jax.jit, static_argnames=("block_batch",))
def net_dgm_forward(t, x, kp, *, block_batch=256):
    """block_batch: rows per grid step (256 fills the v6e/v7x MXU; use 128 on v5e)."""
    tx = jnp.concatenate([t, x], axis=1).astype(jnp.float32)
    B, din = tx.shape
    dim_S = kp["w_h_s"].shape[-1]

    tb = min(block_batch, _round_up(B, 8))   # multiple of 8 -> legal sublane block
    Bp = _round_up(B, tb)
    if Bp != B:
        tx = jnp.pad(tx, ((0, Bp - B), (0, 0)))
    grid = (Bp // tb,)

    # tx/out are tiled over batch; weights/biases use constant index maps so
    # they are DMA'd once and stay VMEM-resident across all batch tiles.
    in_specs = [
        pl.BlockSpec((tb, din), lambda i: (i, 0)),
        pl.BlockSpec(kp["w_x"].shape, lambda i: (0, 0)),
        pl.BlockSpec(kp["b_x"].shape, lambda i: (0, 0)),
        pl.BlockSpec(kp["w_zgr_s"].shape, lambda i: (0, 0, 0)),
        pl.BlockSpec(kp["w_h_s"].shape, lambda i: (0, 0, 0)),
        pl.BlockSpec(kp["w_out_row"].shape, lambda i: (0, 0)),
        pl.BlockSpec(kp["b_out"].shape, lambda i: (0, 0)),
    ]
    # (tb, 1) is legal: last dim 1 equals the full array extent.
    out_specs = pl.BlockSpec((tb, 1), lambda i: (i, 0))

    # Advisory cost estimate so XLA schedules the custom call sensibly.
    flops = (2 * Bp * din * 13 * dim_S                              # hoisted tx projections
             + 3 * 2 * Bp * (dim_S * 3 * dim_S + dim_S * dim_S)     # recurrent matmuls
             + 10 * Bp * dim_S)                                     # gate algebra + out reduce
    transcendentals = 13 * Bp * dim_S
    weight_bytes = sum(int(kp[k].size) * kp[k].dtype.itemsize for k in kp)
    bytes_accessed = Bp * din * 4 + weight_bytes + Bp * 4

    out = pl.pallas_call(
        net_dgm_kernel,
        out_shape=jax.ShapeDtypeStruct((Bp, 1), jnp.float32),
        grid=grid,
        in_specs=in_specs,
        out_specs=out_specs,
        compiler_params=pltpu.CompilerParams(
            dimension_semantics=("parallel",),       # megacore-shards the batch axis on v7x
            vmem_limit_bytes=32 * 1024 * 1024,       # explicit; leaves headroom vs v7x 64 MiB
        ),
        cost_estimate=pl.CostEstimate(
            flops=flops, transcendentals=transcendentals,
            bytes_accessed=bytes_accessed),
    )(tx, kp["w_x"], kp["b_x"], kp["w_zgr_s"], kp["w_h_s"],
      kp["w_out_row"], kp["b_out"])
    return out[:B]


def reference_forward(t, x, p):
    """Pure-JAX f32 reference mirroring the PyTorch forward exactly."""
    tx = jnp.concatenate([t, x], axis=1)
    S = jnp.tanh(tx @ p["w_in"] + p["b_in"])
    for l in range(3):
        Z = jnp.tanh(tx @ p["wz_x"][l] + S @ p["wz_s"][l] + p["bz"][l])
        G = jnp.tanh(tx @ p["wg_x"][l] + S @ p["wg_s"][l] + p["bg"][l])
        R = jnp.tanh(tx @ p["wr_x"][l] + S @ p["wr_s"][l] + p["br"][l])
        H = jnp.tanh(tx @ p["wh_x"][l] + (S * R) @ p["wh_s"][l] + p["bh"][l])
        S = (1.0 - G) * H + Z * S
    return S @ p["w_out"] + p["b_out"]


def reference_forward_bf16(t, x, p):
    """Reference applying the same bf16 matmul casts as the kernel (f32 accumulation)."""
    f32, bf16 = jnp.float32, jnp.bfloat16

    def mm(a, w):
        return jnp.dot(a.astype(bf16), w.astype(bf16), preferred_element_type=f32)

    tx = jnp.concatenate([t, x], axis=1).astype(f32)
    S = jnp.tanh(mm(tx, p["w_in"]) + p["b_in"])
    for l in range(3):
        Z = jnp.tanh(mm(tx, p["wz_x"][l]) + mm(S, p["wz_s"][l]) + p["bz"][l])
        G = jnp.tanh(mm(tx, p["wg_x"][l]) + mm(S, p["wg_s"][l]) + p["bg"][l])
        R = jnp.tanh(mm(tx, p["wr_x"][l]) + mm(S, p["wr_s"][l]) + p["br"][l])
        H = jnp.tanh(mm(tx, p["wh_x"][l]) + mm(S * R, p["wh_s"][l]) + p["bh"][l])
        S = (1.0 - G) * H + Z * S
    return jnp.sum(S * p["w_out"].T, axis=-1, keepdims=True) + p["b_out"]


if __name__ == "__main__":
    dim_x, dim_S, batch = 4, 32, 8

    key = jax.random.PRNGKey(0)
    k_t, k_x, k_p = jax.random.split(key, 3)

    t = jax.random.normal(k_t, (batch, 1), jnp.float32)
    x = jax.random.normal(k_x, (batch, dim_x), jnp.float32)

    params = init_params(k_p, dim_x, dim_S)       # natural (PyTorch-layout) params
    kparams = pack_params(params, dim_x, dim_S)   # fused kernel layout

    out = net_dgm_forward(t, x, kparams)
    out = jax.block_until_ready(out)
    assert out.shape == (batch, 1), out.shape

    # Tight check: kernel vs a JAX reference that applies the same bf16 casts.
    ref_b16 = reference_forward_bf16(t, x, params)
    assert jnp.allclose(out, ref_b16, atol=5e-3, rtol=5e-3), (out, ref_b16)

    # Semantics check vs the full-f32 PyTorch-equivalent forward
    # (loose tolerance because matmul operands run in bf16 on the MXU).
    ref_f32 = reference_forward(t, x, params)
    assert jnp.allclose(out, ref_f32, atol=1e-1, rtol=1e-1), (out, ref_f32)

    print("KERNEL_OK")
</pallas_src>

<mosaic_0001>
module attributes {stable_mosaic.version = 11 : i64} {
  func.func @net_dgm_kernel(%arg0: i32, %arg1: memref<8x5xf32, #tpu.memory_space<vmem>>, %arg2: memref<5x416xbf16, #tpu.memory_space<vmem>>, %arg3: memref<1x416xf32, #tpu.memory_space<vmem>>, %arg4: memref<3x32x96xbf16, #tpu.memory_space<vmem>>, %arg5: memref<3x32x32xbf16, #tpu.memory_space<vmem>>, %arg6: memref<1x32xf32, #tpu.memory_space<vmem>>, %arg7: memref<1x1xf32, #tpu.memory_space<vmem>>, %arg8: memref<8x1xf32, #tpu.memory_space<vmem>>) attributes {dimension_semantics = [#tpu.dimension_semantics<parallel>], iteration_bounds = array<i64: 1>, scalar_prefetch = 0 : i64, scratch_operands = 0 : i64, tpu.core_type = #tpu.core_type<tc>, window_params = [{transform_indices = @transform_0, window_bounds = array<i64: 8, 5>}, {pipeline_mode = #tpu.pipeline_mode<synchronous>, transform_indices = @transform_1, window_bounds = array<i64: 5, 416>}, {pipeline_mode = #tpu.pipeline_mode<synchronous>, transform_indices = @transform_2, window_bounds = array<i64: 1, 416>}, {pipeline_mode = #tpu.pipeline_mode<synchronous>, transform_indices = @transform_3, window_bounds = array<i64: 3, 32, 96>}, {pipeline_mode = #tpu.pipeline_mode<synchronous>, transform_indices = @transform_4, window_bounds = array<i64: 3, 32, 32>}, {pipeline_mode = #tpu.pipeline_mode<synchronous>, transform_indices = @transform_5, window_bounds = array<i64: 1, 32>}, {pipeline_mode = #tpu.pipeline_mode<synchronous>, transform_indices = @transform_6, window_bounds = array<i64: 1, 1>}, {transform_indices = @transform_7, window_bounds = array<i64: 8, 1>}]} {
    %c0 = arith.constant 0 : index
    %c0_0 = arith.constant 0 : index
    %0 = vector.load %arg1[%c0, %c0_0] : memref<8x5xf32, #tpu.memory_space<vmem>>, vector<8x5xf32>
    %1 = arith.truncf %0 : vector<8x5xf32> to vector<8x5xbf16>
    %c0_1 = arith.constant 0 : index
    %c0_2 = arith.constant 0 : index
    %2 = vector.load %arg2[%c0_1, %c0_2] : memref<5x416xbf16, #tpu.memory_space<vmem>>, vector<5x416xbf16>
    %cst = arith.constant dense<0.000000e+00> : vector<8x416xf32>
    %3 = tpu.matmul %1, %2, %cst {dimension_numbers = #tpu.dot_dimension_numbers<[1], [0], [0], [1], [0, 0, 1, 1], [], []>} : vector<8x5xbf16>, vector<5x416xbf16>, vector<8x416xf32> -> vector<8x416xf32>
    %c0_3 = arith.constant 0 : index
    %c0_4 = arith.constant 0 : index
    %4 = vector.load %arg3[%c0_3, %c0_4] : memref<1x416xf32, #tpu.memory_space<vmem>>, vector<1x416xf32>
    %5 = vector.broadcast %4 : vector<1x416xf32> to vector<8x416xf32>
    %6 = arith.addf %3, %5 : vector<8x416xf32>
    %7 = vector.extract_strided_slice %6 {offsets = [0, 384], sizes = [8, 32], strides = [1, 1]} : vector<8x416xf32> to vector<8x32xf32>
    %8 = math.tanh %7 : vector<8x32xf32>
    %9 = vector.extract_strided_slice %6 {offsets = [0, 0], sizes = [8, 96], strides = [1, 1]} : vector<8x416xf32> to vector<8x96xf32>
    %10 = vector.extract_strided_slice %6 {offsets = [0, 96], sizes = [8, 32], strides = [1, 1]} : vector<8x416xf32> to vector<8x32xf32>
    %11 = arith.truncf %8 : vector<8x32xf32> to vector<8x32xbf16>
    %c0_5 = arith.constant 0 : index
    %c0_6 = arith.constant 0 : index
    %c0_7 = arith.constant 0 : index
    %12 = vector.load %arg4[%c0_5, %c0_6, %c0_7] : memref<3x32x96xbf16, #tpu.memory_space<vmem>>, vector<1x32x96xbf16>
    %13 = vector.shape_cast %12 : vector<1x32x96xbf16> to vector<32x96xbf16>
    %cst_8 = arith.constant dense<0.000000e+00> : vector<8x96xf32>
    %14 = tpu.matmul %11, %13, %cst_8 {dimension_numbers = #tpu.dot_dimension_numbers<[1], [0], [0], [1], [0, 0, 1, 1], [], []>} : vector<8x32xbf16>, vector<32x96xbf16>, vector<8x96xf32> -> vector<8x96xf32>
    %15 = arith.addf %9, %14 : vector<8x96xf32>
    %16 = math.tanh %15 : vector<8x96xf32>
    %17 = vector.extract_strided_slice %16 {offsets = [0, 0], sizes = [8, 32], strides = [1, 1]} : vector<8x96xf32> to vector<8x32xf32>
    %18 = vector.extract_strided_slice %16 {offsets = [0, 32], sizes = [8, 32], strides = [1, 1]} : vector<8x96xf32> to vector<8x32xf32>
    %19 = vector.extract_strided_slice %16 {offsets = [0, 64], sizes = [8, 32], strides = [1, 1]} : vector<8x96xf32> to vector<8x32xf32>
    %20 = arith.mulf %8, %19 : vector<8x32xf32>
    %21 = arith.truncf %20 : vector<8x32xf32> to vector<8x32xbf16>
    %c0_9 = arith.constant 0 : index
    %c0_10 = arith.constant 0 : index
    %c0_11 = arith.constant 0 : index
    %22 = vector.load %arg5[%c0_9, %c0_10, %c0_11] : memref<3x32x32xbf16, #tpu.memory_space<vmem>>, vector<1x32x32xbf16>
    %23 = vector.shape_cast %22 : vector<1x32x32xbf16> to vector<32x32xbf16>
    %cst_12 = arith.constant dense<0.000000e+00> : vector<8x32xf32>
    %24 = tpu.matmul %21, %23, %cst_12 {dimension_numbers = #tpu.dot_dimension_numbers<[1], [0], [0], [1], [0, 0, 1, 1], [], []>} : vector<8x32xbf16>, vector<32x32xbf16>, vector<8x32xf32> -> vector<8x32xf32>
    %25 = arith.addf %10, %24 : vector<8x32xf32>
    %26 = math.tanh %25 : vector<8x32xf32>
    %cst_13 = arith.constant 1.000000e+00 : f32
    %27 = vector.broadcast %cst_13 : f32 to vector<8x32xf32>
    %28 = arith.subf %27, %18 : vector<8x32xf32>
    %29 = arith.mulf %28, %26 : vector<8x32xf32>
    %30 = arith.mulf %17, %8 : vector<8x32xf32>
    %31 = arith.addf %29, %30 : vector<8x32xf32>
    %32 = vector.extract_strided_slice %6 {offsets = [0, 128], sizes = [8, 96], strides = [1, 1]} : vector<8x416xf32> to vector<8x96xf32>
    %33 = vector.extract_strided_slice %6 {offsets = [0, 224], sizes = [8, 32], strides = [1, 1]} : vector<8x416xf32> to vector<8x32xf32>
    %34 = arith.truncf %31 : vector<8x32xf32> to vector<8x32xbf16>
    %c1 = arith.constant 1 : index
    %c0_14 = arith.constant 0 : index
    %c0_15 = arith.constant 0 : index
    %35 = vector.load %arg4[%c1, %c0_14, %c0_15] : memref<3x32x96xbf16, #tpu.memory_space<vmem>>, vector<1x32x96xbf16>
    %36 = vector.shape_cast %35 : vector<1x32x96xbf16> to vector<32x96xbf16>
    %cst_16 = arith.constant dense<0.000000e+00> : vector<8x96xf32>
    %37 = tpu.matmul %34, %36, %cst_16 {dimension_numbers = #tpu.dot_dimension_numbers<[1], [0], [0], [1], [0, 0, 1, 1], [], []>} : vector<8x32xbf16>, vector<32x96xbf16>, vector<8x96xf32> -> vector<8x96xf32>
    %38 = arith.addf %32, %37 : vector<8x96xf32>
    %39 = math.tanh %38 : vector<8x96xf32>
    %40 = vector.extract_strided_slice %39 {offsets = [0, 0], sizes = [8, 32], strides = [1, 1]} : vector<8x96xf32> to vector<8x32xf32>
    %41 = vector.extract_strided_slice %39 {offsets = [0, 32], sizes = [8, 32], strides = [1, 1]} : vector<8x96xf32> to vector<8x32xf32>
    %42 = vector.extract_strided_slice %39 {offsets = [0, 64], sizes = [8, 32], strides = [1, 1]} : vector<8x96xf32> to vector<8x32xf32>
    %43 = arith.mulf %31, %42 : vector<8x32xf32>
    %44 = arith.truncf %43 : vector<8x32xf32> to vector<8x32xbf16>
    %c1_17 = arith.constant 1 : index
    %c0_18 = arith.constant 0 : index
    %c0_19 = arith.constant 0 : index
    %45 = vector.load %arg5[%c1_17, %c0_18, %c0_19] : memref<3x32x32xbf16, #tpu.memory_space<vmem>>, vector<1x32x32xbf16>
    %46 = vector.shape_cast %45 : vector<1x32x32xbf16> to vector<32x32xbf16>
    %cst_20 = arith.constant dense<0.000000e+00> : vector<8x32xf32>
    %47 = tpu.matmul %44, %46, %cst_20 {dimension_numbers = #tpu.dot_dimension_numbers<[1], [0], [0], [1], [0, 0, 1, 1], [], []>} : vector<8x32xbf16>, vector<32x32xbf16>, vector<8x32xf32> -> vector<8x32xf32>
    %48 = arith.addf %33, %47 : vector<8x32xf32>
    %49 = math.tanh %48 : vector<8x32xf32>
    %cst_21 = arith.constant 1.000000e+00 : f32
    %50 = vector.broadcast %cst_21 : f32 to vector<8x32xf32>
    %51 = arith.subf %50, %41 : vector<8x32xf32>
    %52 = arith.mulf %51, %49 : vector<8x32xf32>
    %53 = arith.mulf %40, %31 : vector<8x32xf32>
    %54 = arith.addf %52, %53 : vector<8x32xf32>
    %55 = vector.extract_strided_slice %6 {offsets = [0, 256], sizes = [8, 96], strides = [1, 1]} : vector<8x416xf32> to vector<8x96xf32>
    %56 = vector.extract_strided_slice %6 {offsets = [0, 352], sizes = [8, 32], strides = [1, 1]} : vector<8x416xf32> to vector<8x32xf32>
    %57 = arith.truncf %54 : vector<8x32xf32> to vector<8x32xbf16>
    %c2 = arith.constant 2 : index
    %c0_22 = arith.constant 0 : index
    %c0_23 = arith.constant 0 : index
    %58 = vector.load %arg4[%c2, %c0_22, %c0_23] : memref<3x32x96xbf16, #tpu.memory_space<vmem>>, vector<1x32x96xbf16>
    %59 = vector.shape_cast %58 : vector<1x32x96xbf16> to vector<32x96xbf16>
    %cst_24 = arith.constant dense<0.000000e+00> : vector<8x96xf32>
    %60 = tpu.matmul %57, %59, %cst_24 {dimension_numbers = #tpu.dot_dimension_numbers<[1], [0], [0], [1], [0, 0, 1, 1], [], []>} : vector<8x32xbf16>, vector<32x96xbf16>, vector<8x96xf32> -> vector<8x96xf32>
    %61 = arith.addf %55, %60 : vector<8x96xf32>
    %62 = math.tanh %61 : vector<8x96xf32>
    %63 = vector.extract_strided_slice %62 {offsets = [0, 0], sizes = [8, 32], strides = [1, 1]} : vector<8x96xf32> to vector<8x32xf32>
    %64 = vector.extract_strided_slice %62 {offsets = [0, 32], sizes = [8, 32], strides = [1, 1]} : vector<8x96xf32> to vector<8x32xf32>
    %65 = vector.extract_strided_slice %62 {offsets = [0, 64], sizes = [8, 32], strides = [1, 1]} : vector<8x96xf32> to vector<8x32xf32>
    %66 = arith.mulf %54, %65 : vector<8x32xf32>
    %67 = arith.truncf %66 : vector<8x32xf32> to vector<8x32xbf16>
    %c2_25 = arith.constant 2 : index
    %c0_26 = arith.constant 0 : index
    %c0_27 = arith.constant 0 : index
    %68 = vector.load %arg5[%c2_25, %c0_26, %c0_27] : memref<3x32x32xbf16, #tpu.memory_space<vmem>>, vector<1x32x32xbf16>
    %69 = vector.shape_cast %68 : vector<1x32x32xbf16> to vector<32x32xbf16>
    %cst_28 = arith.constant dense<0.000000e+00> : vector<8x32xf32>
    %70 = tpu.matmul %67, %69, %cst_28 {dimension_numbers = #tpu.dot_dimension_numbers<[1], [0], [0], [1], [0, 0, 1, 1], [], []>} : vector<8x32xbf16>, vector<32x32xbf16>, vector<8x32xf32> -> vector<8x32xf32>
    %71 = arith.addf %56, %70 : vector<8x32xf32>
    %72 = math.tanh %71 : vector<8x32xf32>
    %cst_29 = arith.constant 1.000000e+00 : f32
    %73 = vector.broadcast %cst_29 : f32 to vector<8x32xf32>
    %74 = arith.subf %73, %64 : vector<8x32xf32>
    %75 = arith.mulf %74, %72 : vector<8x32xf32>
    %76 = arith.mulf %63, %54 : vector<8x32xf32>
    %77 = arith.addf %75, %76 : vector<8x32xf32>
    %c0_30 = arith.constant 0 : index
    %c0_31 = arith.constant 0 : index
    %78 = vector.load %arg6[%c0_30, %c0_31] : memref<1x32xf32, #tpu.memory_space<vmem>>, vector<1x32xf32>
    %79 = vector.broadcast %78 : vector<1x32xf32> to vector<8x32xf32>
    %80 = arith.mulf %77, %79 : vector<8x32xf32>
    %cst_32 = arith.constant dense<0.000000e+00> : vector<8xf32>
    %81 = vector.multi_reduction <add>, %80, %cst_32 [1] : vector<8x32xf32> to vector<8xf32>
    %82 = vector.shape_cast %81 : vector<8xf32> to vector<8x1xf32>
    %c0_33 = arith.constant 0 : index
    %c0_34 = arith.constant 0 : index
    %83 = vector.load %arg7[%c0_33, %c0_34] : memref<1x1xf32, #tpu.memory_space<vmem>>, vector<1x1xf32>
    %84 = vector.broadcast %83 : vector<1x1xf32> to vector<8x1xf32>
    %85 = arith.addf %82, %84 : vector<8x1xf32>
    %c0_35 = arith.constant 0 : index
    %c0_36 = arith.constant 0 : index
    %86 = vector.load %arg8[%c0_35, %c0_36] : memref<8x1xf32, #tpu.memory_space<vmem>>, vector<8x1xf32>
    tpu.vector_store %arg8[%c0_35, %c0_36], %85 {strides = array<i32>} : memref<8x1xf32, #tpu.memory_space<vmem>>, vector<8x1xf32>,
    return
  }
  func.func @transform_0(%arg0: i32) -> (i32, i32) {
    %c0_i32 = arith.constant 0 : i32
    %c0_i32_0 = arith.constant 0 : i32
    return %arg0, %c0_i32 : i32, i32
  }
  func.func @transform_1(%arg0: i32) -> (i32, i32) {
    %c0_i32 = arith.constant 0 : i32
    %c0_i32_0 = arith.constant 0 : i32
    %c0_i32_1 = arith.constant 0 : i32
    return %c0_i32, %c0_i32_0 : i32, i32
  }
  func.func @transform_2(%arg0: i32) -> (i32, i32) {
    %c0_i32 = arith.constant 0 : i32
    %c0_i32_0 = arith.constant 0 : i32
    %c0_i32_1 = arith.constant 0 : i32
    return %c0_i32, %c0_i32_0 : i32, i32
  }
  func.func @transform_3(%arg0: i32) -> (i32, i32, i32) {
    %c0_i32 = arith.constant 0 : i32
    %c0_i32_0 = arith.constant 0 : i32
    %c0_i32_1 = arith.constant 0 : i32
    %c0_i32_2 = arith.constant 0 : i32
    return %c0_i32, %c0_i32_0, %c0_i32_1 : i32, i32, i32
  }
  func.func @transform_4(%arg0: i32) -> (i32, i32, i32) {
    %c0_i32 = arith.constant 0 : i32
    %c0_i32_0 = arith.constant 0 : i32
    %c0_i32_1 = arith.constant 0 : i32
    %c0_i32_2 = arith.constant 0 : i32
    return %c0_i32, %c0_i32_0, %c0_i32_1 : i32, i32, i32
  }
  func.func @transform_5(%arg0: i32) -> (i32, i32) {
    %c0_i32 = arith.constant 0 : i32
    %c0_i32_0 = arith.constant 0 : i32
    %c0_i32_1 = arith.constant 0 : i32
    return %c0_i32, %c0_i32_0 : i32, i32
  }
  func.func @transform_6(%arg0: i32) -> (i32, i32) {
    %c0_i32 = arith.constant 0 : i32
    %c0_i32_0 = arith.constant 0 : i32
    %c0_i32_1 = arith.constant 0 : i32
    return %c0_i32, %c0_i32_0 : i32, i32
  }
  func.func @transform_7(%arg0: i32) -> (i32, i32) {
    %c0_i32 = arith.constant 0 : i32
    %c0_i32_0 = arith.constant 0 : i32
    return %arg0, %c0_i32 : i32, i32
  }
}

</mosaic_0001>

<llo_original>
// kernel: net_dgm_forward.1
$region0: #{net_dgm_forward.1}
  #allocation0 [shape = 'u32[]', space=smem, size = 0x4, offset = 0x4, fixed_abs, tag = 'smem constant byte address 0x4 - core index']
  #allocation1 [shape = 'u32[144,128]{1,0:T(1,128)}', space=vmem, size = 0x12000, scoped, tag = 'internal scratch']
  #allocation2 [shape = 'f32[1,1]{1,0:T(1,128)S(1)}', space=vmem, size = 0x200, scoped, tag = 'scoped memory for net_dgm_forward.1']
  %s0 = inlined_call_operand.vmem [shape: f32[8,5], index: 0, kind: input, shape index: {}]
  %s1 = inlined_call_operand.hbm [shape: bf16[5,416], index: 1, kind: input, shape index: {}]
  %s2 = inlined_call_operand.vmem [shape: f32[1,416], index: 2, kind: input, shape index: {}]
  %s3 = inlined_call_operand.vmem [shape: bf16[3,32,96], index: 3, kind: input, shape index: {}]
  %s4 = inlined_call_operand.hbm [shape: bf16[3,32,32], index: 4, kind: input, shape index: {}]
  %s5 = inlined_call_operand.hbm [shape: f32[1,32], index: 5, kind: input, shape index: {}]
  %s6 = inlined_call_operand.<no memory space> [shape: f32[1,1], index: 6, kind: input, shape index: {}]
  %s7 = inlined_call_operand.vmem [shape: f32[8,1], index: 7, kind: output, shape index: {}]
  %s8 = sld [smem:[#allocation0]]
  $region50: #{net_dgm_forward.1} parent=0
    _
  %s10 = ssub.s32 1, %s8
  %s11 = scalar_select 0, %s10, %s8
  %v12 = vstv %s6
  %13 = vst [vmem:[#allocation2] sm:$0x1] %v12
  $region1: #{net_dgm_forward.1} parent=0
    #allocation3 [shape = 'u8[8192]{0}', space=vmem, size = 0x2000, scoped, tag = 'input window, operand 1, single buffered']
    #allocation4 [shape = 's32[1]{0}', space=sflag, size = 0x4, scoped, tag = 'scoped memory for net_dgm_forward.1']
    #allocation5 [shape = 'u8[24576]{0}', space=vmem, size = 0x6000, scoped, tag = 'input window, operand 4, single buffered']
    #allocation6 [shape = 's32[1]{0}', space=sflag, size = 0x4, scoped, tag = 'scoped memory for net_dgm_forward.1']
    #allocation7 [shape = 'u8[512]{0}', space=vmem, size = 0x400, scoped, tag = 'input window, operand 5, single buffered']
    %14 = vsyncpa [#allocation4], 0
    %15 = vsyncpa [#allocation6], 0
    // Predicated region
    $region2: #{net_dgm_forward.1} parent=1 // pred_check
      _
    $region3: #{net_dgm_forward.1} parent=1 // pred_check_branch
      %17 = sbr.rel (0) target = $region5
    $region4: #{net_dgm_forward.1} parent=1 // pred_region
      _
    $region5: #{net_dgm_forward.1} parent=1 // pred_fallthru
      _
    // Predicated region
    $region6: #{net_dgm_forward.1} parent=1 // pred_check
      _
    $region7: #{net_dgm_forward.1} parent=1 // pred_check_branch
      %19 = sbr.rel (0) target = $region9
    $region8: #{net_dgm_forward.1} parent=1 // pred_region
      %s21 = ssub.s32 256, 256
      %22 = vsyncadd [#allocation4], %s21
      %s24 = sshll.u32 [#allocation3], 4
      %s25 = int_to_ptr.vmem [resolvable:$true] %s24
      %27 = dma.hbm_to_vmem [thread:$0]  %s1, 256, %s25, [#allocation4]
    $region9: #{net_dgm_forward.1} parent=1 // pred_fallthru
      _
    // Predicated region
    $region10: #{net_dgm_forward.1} parent=1 // pred_check
      _
    $region11: #{net_dgm_forward.1} parent=1 // pred_check_branch
      %29 = sbr.rel (0) target = $region13
    $region12: #{net_dgm_forward.1} parent=1 // pred_region
      _
    $region13: #{net_dgm_forward.1} parent=1 // pred_fallthru
      _
    // Predicated region
    $region14: #{net_dgm_forward.1} parent=1 // pred_check
      _
    $region15: #{net_dgm_forward.1} parent=1 // pred_check_branch
      %31 = sbr.rel (0) target = $region17
    $region16: #{net_dgm_forward.1} parent=1 // pred_region
      _
    $region17: #{net_dgm_forward.1} parent=1 // pred_fallthru
      _
    // Predicated region
    $region18: #{net_dgm_forward.1} parent=1 // pred_check
      _
    $region19: #{net_dgm_forward.1} parent=1 // pred_check_branch
      %33 = sbr.rel (0) target = $region21
    $region20: #{net_dgm_forward.1} parent=1 // pred_region
      %s35 = ssub.s32 768, 768
      %36 = vsyncadd [#allocation6], %s35
      %s37 = sshll.u32 [#allocation5], 4
      %s38 = int_to_ptr.vmem [resolvable:$true] %s37
      %43 = dma.hbm_to_vmem [thread:$0]  %s4, 768, %s38, [#allocation6], 64, 64, 4
    $region21: #{net_dgm_forward.1} parent=1 // pred_fallthru
      _
    // Predicated region
    $region22: #{net_dgm_forward.1} parent=1 // pred_check
      _
    $region23: #{net_dgm_forward.1} parent=1 // pred_check_branch
      %45 = sbr.rel (0) target = $region25
    $region24: #{net_dgm_forward.1} parent=1 // pred_region
      %s47 = ssub.s32 16, 16
      %48 = vsyncadd [#allocation6], %s47
      %s50 = sshll.u32 [#allocation7], 4
      %s51 = int_to_ptr.vmem [resolvable:$true] %s50
      %53 = dma.hbm_to_vmem [thread:$0]  %s5, 16, %s51, [#allocation6]
    $region25: #{net_dgm_forward.1} parent=1 // pred_fallthru
      _
    // Predicated region
    $region26: #{net_dgm_forward.1} parent=1 // pred_check
      _
    $region27: #{net_dgm_forward.1} parent=1 // pred_check_branch
      %55 = sbr.rel (0) target = $region29
    $region28: #{net_dgm_forward.1} parent=1 // pred_region
      _
    $region29: #{net_dgm_forward.1} parent=1 // pred_fallthru
      _
    // Predicated region
    $region30: #{net_dgm_forward.1} parent=1 // pred_check
      _
    $region31: #{net_dgm_forward.1} parent=1 // pred_check_branch
      %57 = sbr.rel (0) target = $region33
    $region32: #{net_dgm_forward.1} parent=1 // pred_region
      %58 = dma.done [#allocation4], 256
    $region33: #{net_dgm_forward.1} parent=1 // pred_fallthru
      _
    // Predicated region
    $region34: #{net_dgm_forward.1} parent=1 // pred_check
      _
    $region35: #{net_dgm_forward.1} parent=1 // pred_check_branch
      %60 = sbr.rel (0) target = $region37
    $region36: #{net_dgm_forward.1} parent=1 // pred_region
      %61 = dma.done [#allocation6], 768
    $region37: #{net_dgm_forward.1} parent=1 // pred_fallthru
      _
    // Predicated region
    $region38: #{net_dgm_forward.1} parent=1 // pred_check
      _
    $region39: #{net_dgm_forward.1} parent=1 // pred_check_branch
      %63 = sbr.rel (0) target = $region41
    $region40: #{net_dgm_forward.1} parent=1 // pred_region
      %64 = dma.done [#allocation6], 16
    $region41: #{net_dgm_forward.1} parent=1 // pred_fallthru
      _
    %v66 = vld [vmem:[%s0] sm:$0xff]
    %v67 = vpack.c.bf16 %v66, %v66
    %v68 = vld [vmem:[#allocation3] sm:$0x77]
    %v69 = vld [vmem:[#allocation3 + $0x8] sm:$0x77]
    %v70 = vld [vmem:[%s2] sm:$0xf]
    %v72 = vlaneseq
    %v73 = vshrl.u32 %v72, 7
    %v74 = vsub.s32 0, %v73
    %v75 = vrot.slane %v70, %v74
    %v76 = vlaneseq
    %v77 = vshrl.u32 %v76, 7
    %v78 = vsub.s32 1, %v77
    %v79 = vrot.slane %v70, %v78
    %v80 = vlaneseq
    %v81 = vshrl.u32 %v80, 7
    %v82 = vsub.s32 2, %v81
    %v83 = vrot.slane %v70, %v82
    %v84 = vlaneseq
    %v85 = vshrl.u32 %v84, 7
    %v86 = vsub.s32 3, %v85
    %v87 = vrot.slane %v70, %v86
    %v94 = vunpack.c.l.b16 %v68
    %v95 = vunpack.c.h.b16 %v68
    %v96 = vunpack.c.l.b16 %v69
    %v97 = vunpack.c.h.b16 %v69
    %v98 = vpack.c.b16 %v94, %v94
    %v99 = vpack.c.b16 %v95, %v95
    %v100 = vpack.c.b16 %v96, %v96
    %v101 = vpack.c.b16 %v97, %v97
    %vm102 = vcmask 39936
    %v104 = vsel %vm102, %v67, 0
    %vm106 = vcmask 1041408
    %vm107 = vcmask 1042432
    %v108 = vsel %vm106, 4294967295, 65535
    %v109 = vsel %vm107, %v108, 0
    %v111 = vand.u32 %v98, %v109
    %v114 = vand.u32 %v99, %v109
    %v117 = vand.u32 %v100, %v109
    %v120 = vand.u32 %v101, %v109
    %122 = vmatprep.subr.bf16.mxu0 %v114
    %123 = vmatpush1.bf16.msra.mxu0 %v111
    %124 = vmatprep.subr.bf16.mxu0 0
    %125 = vmatpush1.bf16.msra.mxu0 0
    %126 = vmatprep.subr.bf16.mxu0 0
    %127 = vmatpush1.bf16.msra.mxu0 0
    %128 = vmatprep.subr.bf16.mxu0 0
    %129 = vmatpush1.bf16.msra.mxu0 0
    %130 = vmatprep.subr.bf16.mxu0 0
    %131 = vmatpush1.bf16.msra.mxu0 0
    %132 = vmatprep.subr.bf16.mxu0 0
    %133 = vmatpush1.bf16.msra.mxu0 0
    %134 = vmatprep.subr.bf16.mxu0 0
    %135 = vmatpush1.bf16.msra.mxu0 0
    %136 = vmatprep.subr.bf16.mxu0 0
    %137 = vmatpush1.bf16.msra.mxu0 0
    %138 = vmatprep.subr.bf16.mxu0 0
    %139 = vmatpush1.bf16.msra.mxu0 0
    %140 = vmatprep.subr.bf16.mxu0 0
    %141 = vmatpush1.bf16.msra.mxu0 0
    %142 = vmatprep.subr.bf16.mxu0 0
    %143 = vmatpush1.bf16.msra.mxu0 0
    %144 = vmatprep.subr.bf16.mxu0 0
    %145 = vmatpush1.bf16.msra.mxu0 0
    %146 = vmatprep.subr.bf16.mxu0 0
    %147 = vmatpush1.bf16.msra.mxu0 0
    %148 = vmatprep.subr.bf16.mxu0 0
    %149 = vmatpush1.bf16.msra.mxu0 0
    %150 = vmatprep.subr.bf16.mxu0 0
    %151 = vmatpush1.bf16.msra.mxu0 0
    %152 = vmatprep.subr.bf16.mxu0 0
    %153 = vmatpush1.bf16.msra.mxu0 0
    %154 = vmatprep.mubr.bf16.mxu0 0
    %155 = vmatmul.mubr.bf16.gmra.mrb[0].mxu0 %v104
    %v156 = vpop.f32.mrb[0].mxu0
    %v157 = vadd.f32 %v75, %v156
    %v158 = vpop.f32.mrb[0].mxu0
    %v159 = vadd.f32 %v79, %v158
    %v160 = vpop.f32.mrb[0].mxu0
    %v161 = vpop.f32.mrb[0].mxu0
    %162 = vdwg.mxu0
    %163 = vmatprep.subr.bf16.mxu0 %v120
    %164 = vmatpush1.bf16.msra.mxu0 %v117
    %165 = vmatprep.subr.bf16.mxu0 0
    %166 = vmatpush1.bf16.msra.mxu0 0
    %167 = vmatprep.subr.bf16.mxu0 0
    %168 = vmatpush1.bf16.msra.mxu0 0
    %169 = vmatprep.subr.bf16.mxu0 0
    %170 = vmatpush1.bf16.msra.mxu0 0
    %171 = vmatprep.subr.bf16.mxu0 0
    %172 = vmatpush1.bf16.msra.mxu0 0
    %173 = vmatprep.subr.bf16.mxu0 0
    %174 = vmatpush1.bf16.msra.mxu0 0
    %175 = vmatprep.subr.bf16.mxu0 0
    %176 = vmatpush1.bf16.msra.mxu0 0
    %177 = vmatprep.subr.bf16.mxu0 0
    %178 = vmatpush1.bf16.msra.mxu0 0
    %179 = vmatprep.subr.bf16.mxu0 0
    %180 = vmatpush1.bf16.msra.mxu0 0
    %181 = vmatprep.subr.bf16.mxu0 0
    %182 = vmatpush1.bf16.msra.mxu0 0
    %183 = vmatprep.subr.bf16.mxu0 0
    %184 = vmatpush1.bf16.msra.mxu0 0
    %185 = vmatprep.subr.bf16.mxu0 0
    %186 = vmatpush1.bf16.msra.mxu0 0
    %187 = vmatprep.subr.bf16.mxu0 0
    %188 = vmatpush1.bf16.msra.mxu0 0
    %189 = vmatprep.subr.bf16.mxu0 0
    %190 = vmatpush1.bf16.msra.mxu0 0
    %191 = vmatprep.subr.bf16.mxu0 0
    %192 = vmatpush1.bf16.msra.mxu0 0
    %193 = vmatprep.subr.bf16.mxu0 0
    %194 = vmatpush1.bf16.msra.mxu0 0
    %195 = vmatprep.mubr.bf16.mxu0 0
    %196 = vmatmul.mubr.bf16.gmra.mrb[0].mxu0 %v104
    %v197 = vpop.f32.mrb[0].mxu0
    %v198 = vadd.f32 %v83, %v197
    %v199 = vpop.f32.mrb[0].mxu0
    %v200 = vadd.f32 %v87, %v199
    %v201 = vpop.f32.mrb[0].mxu0
    %v202 = vpop.f32.mrb[0].mxu0
    %203 = vdwg.mxu0
    %v204 = vtanh.pop %v200
    %v205 = vpack.c.bf16 %v204, %v204
    %v206 = vld [vmem:[%s3] sm:$0xf]
    %v207 = vld [vmem:[%s3 + $0x4] sm:$0xf]
    %v208 = vld [vmem:[%s3 + $0x8] sm:$0xf]
    %v209 = vld [vmem:[%s3 + $0xc] sm:$0xf]
    %v214 = vunpack.c.l.b16 %v206
    %v215 = vunpack.c.l.b16 %v207
    %v216 = vunpack.c.l.b16 %v208
    %v217 = vunpack.c.l.b16 %v209
    %v218 = vpack.c.b16 %v215, %v214
    %v219 = vpack.c.b16 %v217, %v216
    %vm222 = vcmask 261120
    %v224 = vsel %vm222, %v205, 0
    %226 = vmatprep.subr.bf16.mxu0 0
    %227 = vmatpush1.bf16.msra.mxu0 %v218
    %228 = vmatprep.subr.bf16.mxu0 0
    %229 = vmatpush1.bf16.msra.mxu0 %v219
    %230 = vmatprep.subr.bf16.mxu0 0
    %231 = vmatpush1.bf16.msra.mxu0 0
    %232 = vmatprep.subr.bf16.mxu0 0
    %233 = vmatpush1.bf16.msra.mxu0 0
    %234 = vmatprep.subr.bf16.mxu0 0
    %235 = vmatpush1.bf16.msra.mxu0 0
    %236 = vmatprep.subr.bf16.mxu0 0
    %237 = vmatpush1.bf16.msra.mxu0 0
    %238 = vmatprep.subr.bf16.mxu0 0
    %239 = vmatpush1.bf16.msra.mxu0 0
    %240 = vmatprep.subr.bf16.mxu0 0
    %241 = vmatpush1.bf16.msra.mxu0 0
    %242 = vmatprep.subr.bf16.mxu0 0
    %243 = vmatpush1.bf16.msra.mxu0 0
    %244 = vmatprep.subr.bf16.mxu0 0
    %245 = vmatpush1.bf16.msra.mxu0 0
    %246 = vmatprep.subr.bf16.mxu0 0
    %247 = vmatpush1.bf16.msra.mxu0 0
    %248 = vmatprep.subr.bf16.mxu0 0
    %249 = vmatpush1.bf16.msra.mxu0 0
    %250 = vmatprep.subr.bf16.mxu0 0
    %251 = vmatpush1.bf16.msra.mxu0 0
    %252 = vmatprep.subr.bf16.mxu0 0
    %253 = vmatpush1.bf16.msra.mxu0 0
    %254 = vmatprep.subr.bf16.mxu0 0
    %255 = vmatpush1.bf16.msra.mxu0 0
    %256 = vmatprep.subr.bf16.mxu0 0
    %257 = vmatpush1.bf16.msra.mxu0 0
    %258 = vmatprep.mubr.bf16.mxu0 0
    %259 = vmatmul.mubr.bf16.gmra.mrb[0].mxu0 %v224
    %v260 = vpop.f32.mrb[0].mxu0
    %v261 = vadd.f32 0.0, %v260
    %v262 = vpop.f32.mrb[0].mxu0
    %v263 = vpop.f32.mrb[0].mxu0
    %v264 = vpop.f32.mrb[0].mxu0
    %265 = vdwg.mxu0
    %v266 = vadd.f32 %v157, %v261
    %v267 = vtanh.pop %v266
    %269 = vrot.lane.b32.xlu0 %v267, 64
    %v270 = vpop.permute.xlu0 %269
    %v272 = vmul.f32 %v204, %v270
    %v273 = vpack.c.bf16 %v272, %v272
    %v274 = vld [vmem:[#allocation5] sm:$0xf]
    %v275 = vld [vmem:[#allocation5 + $0x4] sm:$0xf]
    %v276 = vld [vmem:[#allocation5 + $0x8] sm:$0xf]
    %v277 = vld [vmem:[#allocation5 + $0xc] sm:$0xf]
    %v282 = vunpack.c.l.b16 %v274
    %v283 = vunpack.c.l.b16 %v275
    %v284 = vunpack.c.l.b16 %v276
    %v285 = vunpack.c.l.b16 %v277
    %v286 = vpack.c.b16 %v283, %v282
    %v287 = vpack.c.b16 %v285, %v284
    %v291 = vsel %vm222, %v273, 0
    %293 = vmatprep.subr.bf16.mxu0 0
    %294 = vmatpush1.bf16.msra.mxu0 %v286
    %295 = vmatprep.subr.bf16.mxu0 0
    %296 = vmatpush1.bf16.msra.mxu0 %v287
    %297 = vmatprep.subr.bf16.mxu0 0
    %298 = vmatpush1.bf16.msra.mxu0 0
    %299 = vmatprep.subr.bf16.mxu0 0
    %300 = vmatpush1.bf16.msra.mxu0 0
    %301 = vmatprep.subr.bf16.mxu0 0
    %302 = vmatpush1.bf16.msra.mxu0 0
    %303 = vmatprep.subr.bf16.mxu0 0
    %304 = vmatpush1.bf16.msra.mxu0 0
    %305 = vmatprep.subr.bf16.mxu0 0
    %306 = vmatpush1.bf16.msra.mxu0 0
    %307 = vmatprep.subr.bf16.mxu0 0
    %308 = vmatpush1.bf16.msra.mxu0 0
    %309 = vmatprep.subr.bf16.mxu0 0
    %310 = vmatpush1.bf16.msra.mxu0 0
    %311 = vmatprep.subr.bf16.mxu0 0
    %312 = vmatpush1.bf16.msra.mxu0 0
    %313 = vmatprep.subr.bf16.mxu0 0
    %314 = vmatpush1.bf16.msra.mxu0 0
    %315 = vmatprep.subr.bf16.mxu0 0
    %316 = vmatpush1.bf16.msra.mxu0 0
    %317 = vmatprep.subr.bf16.mxu0 0
    %318 = vmatpush1.bf16.msra.mxu0 0
    %319 = vmatprep.subr.bf16.mxu0 0
    %320 = vmatpush1.bf16.msra.mxu0 0
    %321 = vmatprep.subr.bf16.mxu0 0
    %322 = vmatpush1.bf16.msra.mxu0 0
    %323 = vmatprep.subr.bf16.mxu0 0
    %324 = vmatpush1.bf16.msra.mxu0 0
    %325 = vmatprep.mubr.bf16.mxu0 0
    %326 = vmatmul.mubr.bf16.gmra.mrb[0].mxu0 %v291
    %v327 = vpop.f32.mrb[0].mxu0
    %v328 = vadd.f32 0.0, %v327
    %v329 = vpop.f32.mrb[0].mxu0
    %v330 = vpop.f32.mrb[0].mxu0
    %v331 = vpop.f32.mrb[0].mxu0
    %332 = vdwg.mxu0
    %334 = vrot.lane.b32.xlu0 %v328, 96
    %v335 = vpop.permute.xlu0 %334
    %v337 = vadd.f32 %v157, %v335
    %v338 = vtanh.pop %v337
    %v339 = vsub.f32 1.0, %v267
    %341 = vrot.lane.b32.xlu0 %v338, 64
    %v342 = vpop.permute.xlu0 %341
    %v344 = vmul.f32 %v339, %v342
    %v345 = vmul.f32 %v267, %v204
    %347 = vrot.lane.b32.xlu0 %v345, 32
    %v348 = vpop.permute.xlu0 %347
    %v350 = vadd.f32 %v344, %v348
    %v351 = vpack.c.bf16 %v350, %v350
    %s352 = scalar_lea.vmem %s3, 16
    %v353 = vld [vmem:[%s352] sm:$0xf]
    %v354 = vld [vmem:[%s352 + $0x4] sm:$0xf]
    %v355 = vld [vmem:[%s352 + $0x8] sm:$0xf]
    %v356 = vld [vmem:[%s352 + $0xc] sm:$0xf]
    %358 = vrot.lane.b32.xlu0 %v351, 96
    %v359 = vpop.permute.xlu0 %358
    %v364 = vunpack.c.l.b16 %v353
    %v365 = vunpack.c.l.b16 %v354
    %v366 = vunpack.c.l.b16 %v355
    %v367 = vunpack.c.l.b16 %v356
    %v368 = vpack.c.b16 %v365, %v364
    %v369 = vpack.c.b16 %v367, %v366
    %v373 = vsel %vm222, %v359, 0
    %375 = vmatprep.subr.bf16.mxu0 0
    %376 = vmatpush1.bf16.msra.mxu0 %v368
    %377 = vmatprep.subr.bf16.mxu0 0
    %378 = vmatpush1.bf16.msra.mxu0 %v369
    %379 = vmatprep.subr.bf16.mxu0 0
    %380 = vmatpush1.bf16.msra.mxu0 0
    %381 = vmatprep.subr.bf16.mxu0 0
    %382 = vmatpush1.bf16.msra.mxu0 0
    %383 = vmatprep.subr.bf16.mxu0 0
    %384 = vmatpush1.bf16.msra.mxu0 0
    %385 = vmatprep.subr.bf16.mxu0 0
    %386 = vmatpush1.bf16.msra.mxu0 0
    %387 = vmatprep.subr.bf16.mxu0 0
    %388 = vmatpush1.bf16.msra.mxu0 0
    %389 = vmatprep.subr.bf16.mxu0 0
    %390 = vmatpush1.bf16.msra.mxu0 0
    %391 = vmatprep.subr.bf16.mxu0 0
    %392 = vmatpush1.bf16.msra.mxu0 0
    %393 = vmatprep.subr.bf16.mxu0 0
    %394 = vmatpush1.bf16.msra.mxu0 0
    %395 = vmatprep.subr.bf16.mxu0 0
    %396 = vmatpush1.bf16.msra.mxu0 0
    %397 = vmatprep.subr.bf16.mxu0 0
    %398 = vmatpush1.bf16.msra.mxu0 0
    %399 = vmatprep.subr.bf16.mxu0 0
    %400 = vmatpush1.bf16.msra.mxu0 0
    %401 = vmatprep.subr.bf16.mxu0 0
    %402 = vmatpush1.bf16.msra.mxu0 0
    %403 = vmatprep.subr.bf16.mxu0 0
    %404 = vmatpush1.bf16.msra.mxu0 0
    %405 = vmatprep.subr.bf16.mxu0 0
    %406 = vmatpush1.bf16.msra.mxu0 0
    %407 = vmatprep.mubr.bf16.mxu0 0
    %408 = vmatmul.mubr.bf16.gmra.mrb[0].mxu0 %v373
    %v409 = vpop.f32.mrb[0].mxu0
    %v410 = vadd.f32 0.0, %v409
    %v411 = vpop.f32.mrb[0].mxu0
    %v412 = vpop.f32.mrb[0].mxu0
    %v413 = vpop.f32.mrb[0].mxu0
    %414 = vdwg.mxu0
    %v415 = vadd.f32 %v159, %v410
    %v416 = vtanh.pop %v415
    %418 = vrot.lane.b32.xlu0 %v416, 96
    %v419 = vpop.permute.xlu0 %418
    %v421 = vmul.f32 %v350, %v419
    %v422 = vpack.c.bf16 %v421, %v421
    %s423 = scalar_lea.vmem [#allocation5], 16
    %v424 = vld [vmem:[%s423] sm:$0xf]
    %v425 = vld [vmem:[%s423 + $0x4] sm:$0xf]
    %v426 = vld [vmem:[%s423 + $0x8] sm:$0xf]
    %v427 = vld [vmem:[%s423 + $0xc] sm:$0xf]
    %429 = vrot.lane.b32.xlu0 %v422, 96
    %v430 = vpop.permute.xlu0 %429
    %v435 = vunpack.c.l.b16 %v424
    %v436 = vunpack.c.l.b16 %v425
    %v437 = vunpack.c.l.b16 %v426
    %v438 = vunpack.c.l.b16 %v427
    %v439 = vpack.c.b16 %v436, %v435
    %v440 = vpack.c.b16 %v438, %v437
    %v444 = vsel %vm222, %v430, 0
    %446 = vmatprep.subr.bf16.mxu0 0
    %447 = vmatpush1.bf16.msra.mxu0 %v439
    %448 = vmatprep.subr.bf16.mxu0 0
    %449 = vmatpush1.bf16.msra.mxu0 %v440
    %450 = vmatprep.subr.bf16.mxu0 0
    %451 = vmatpush1.bf16.msra.mxu0 0
    %452 = vmatprep.subr.bf16.mxu0 0
    %453 = vmatpush1.bf16.msra.mxu0 0
    %454 = vmatprep.subr.bf16.mxu0 0
    %455 = vmatpush1.bf16.msra.mxu0 0
    %456 = vmatprep.subr.bf16.mxu0 0
    %457 = vmatpush1.bf16.msra.mxu0 0
    %458 = vmatprep.subr.bf16.mxu0 0
    %459 = vmatpush1.bf16.msra.mxu0 0
    %460 = vmatprep.subr.bf16.mxu0 0
    %461 = vmatpush1.bf16.msra.mxu0 0
    %462 = vmatprep.subr.bf16.mxu0 0
    %463 = vmatpush1.bf16.msra.mxu0 0
    %464 = vmatprep.subr.bf16.mxu0 0
    %465 = vmatpush1.bf16.msra.mxu0 0
    %466 = vmatprep.subr.bf16.mxu0 0
    %467 = vmatpush1.bf16.msra.mxu0 0
    %468 = vmatprep.subr.bf16.mxu0 0
    %469 = vmatpush1.bf16.msra.mxu0 0
    %470 = vmatprep.subr.bf16.mxu0 0
    %471 = vmatpush1.bf16.msra.mxu0 0
    %472 = vmatprep.subr.bf16.mxu0 0
    %473 = vmatpush1.bf16.msra.mxu0 0
    %474 = vmatprep.subr.bf16.mxu0 0
    %475 = vmatpush1.bf16.msra.mxu0 0
    %476 = vmatprep.subr.bf16.mxu0 0
    %477 = vmatpush1.bf16.msra.mxu0 0
    %478 = vmatprep.mubr.bf16.mxu0 0
    %479 = vmatmul.mubr.bf16.gmra.mrb[0].mxu0 %v444
    %v480 = vpop.f32.mrb[0].mxu0
    %v481 = vadd.f32 0.0, %v480
    %v482 = vpop.f32.mrb[0].mxu0
    %v483 = vpop.f32.mrb[0].mxu0
    %v484 = vpop.f32.mrb[0].mxu0
    %485 = vdwg.mxu0
    %487 = vrot.lane.b32.xlu0 %v481, 96
    %v488 = vpop.permute.xlu0 %487
    %v490 = vadd.f32 %v159, %v488
    %v491 = vtanh.pop %v490
    %v492 = vsub.f32 1.0, %v416
    %494 = vrot.lane.b32.xlu0 %v491, 64
    %v495 = vpop.permute.xlu0 %494
    %v497 = vmul.f32 %v492, %v495
    %499 = vrot.lane.b32.xlu0 %v350, 96
    %v500 = vpop.permute.xlu0 %499
    %v502 = vmul.f32 %v416, %v500
    %504 = vrot.lane.b32.xlu0 %v502, 32
    %v505 = vpop.permute.xlu0 %504
    %v507 = vadd.f32 %v497, %v505
    %v508 = vpack.c.bf16 %v507, %v507
    %s509 = scalar_lea.vmem %s3, 32
    %v510 = vld [vmem:[%s509] sm:$0xf]
    %v511 = vld [vmem:[%s509 + $0x4] sm:$0xf]
    %v512 = vld [vmem:[%s509 + $0x8] sm:$0xf]
    %v513 = vld [vmem:[%s509 + $0xc] sm:$0xf]
    %515 = vrot.lane.b32.xlu0 %v508, 96
    %v516 = vpop.permute.xlu0 %515
    %v521 = vunpack.c.l.b16 %v510
    %v522 = vunpack.c.l.b16 %v511
    %v523 = vunpack.c.l.b16 %v512
    %v524 = vunpack.c.l.b16 %v513
    %v525 = vpack.c.b16 %v522, %v521
    %v526 = vpack.c.b16 %v524, %v523
    %v530 = vsel %vm222, %v516, 0
    %532 = vmatprep.subr.bf16.mxu0 0
    %533 = vmatpush1.bf16.msra.mxu0 %v525
    %534 = vmatprep.subr.bf16.mxu0 0
    %535 = vmatpush1.bf16.msra.mxu0 %v526
    %536 = vmatprep.subr.bf16.mxu0 0
    %537 = vmatpush1.bf16.msra.mxu0 0
    %538 = vmatprep.subr.bf16.mxu0 0
    %539 = vmatpush1.bf16.msra.mxu0 0
    %540 = vmatprep.subr.bf16.mxu0 0
    %541 = vmatpush1.bf16.msra.mxu0 0
    %542 = vmatprep.subr.bf16.mxu0 0
    %543 = vmatpush1.bf16.msra.mxu0 0
    %544 = vmatprep.subr.bf16.mxu0 0
    %545 = vmatpush1.bf16.msra.mxu0 0
    %546 = vmatprep.subr.bf16.mxu0 0
    %547 = vmatpush1.bf16.msra.mxu0 0
    %548 = vmatprep.subr.bf16.mxu0 0
    %549 = vmatpush1.bf16.msra.mxu0 0
    %550 = vmatprep.subr.bf16.mxu0 0
    %551 = vmatpush1.bf16.msra.mxu0 0
    %552 = vmatprep.subr.bf16.mxu0 0
    %553 = vmatpush1.bf16.msra.mxu0 0
    %554 = vmatprep.subr.bf16.mxu0 0
    %555 = vmatpush1.bf16.msra.mxu0 0
    %556 = vmatprep.subr.bf16.mxu0 0
    %557 = vmatpush1.bf16.msra.mxu0 0
    %558 = vmatprep.subr.bf16.mxu0 0
    %559 = vmatpush1.bf16.msra.mxu0 0
    %560 = vmatprep.subr.bf16.mxu0 0
    %561 = vmatpush1.bf16.msra.mxu0 0
    %562 = vmatprep.subr.bf16.mxu0 0
    %563 = vmatpush1.bf16.msra.mxu0 0
    %564 = vmatprep.mubr.bf16.mxu0 0
    %565 = vmatmul.mubr.bf16.gmra.mrb[0].mxu0 %v530
    %v566 = vpop.f32.mrb[0].mxu0
    %v567 = vadd.f32 0.0, %v566
    %v568 = vpop.f32.mrb[0].mxu0
    %v569 = vpop.f32.mrb[0].mxu0
    %v570 = vpop.f32.mrb[0].mxu0
    %571 = vdwg.mxu0
    %v572 = vadd.f32 %v198, %v567
    %v573 = vtanh.pop %v572
    %575 = vrot.lane.b32.xlu0 %v573, 96
    %v576 = vpop.permute.xlu0 %575
    %v578 = vmul.f32 %v507, %v576
    %v579 = vpack.c.bf16 %v578, %v578
    %s580 = scalar_lea.vmem [#allocation5], 32
    %v581 = vld [vmem:[%s580] sm:$0xf]
    %v582 = vld [vmem:[%s580 + $0x4] sm:$0xf]
    %v583 = vld [vmem:[%s580 + $0x8] sm:$0xf]
    %v584 = vld [vmem:[%s580 + $0xc] sm:$0xf]
    %586 = vrot.lane.b32.xlu0 %v579, 96
    %v587 = vpop.permute.xlu0 %586
    %v592 = vunpack.c.l.b16 %v581
    %v593 = vunpack.c.l.b16 %v582
    %v594 = vunpack.c.l.b16 %v583
    %v595 = vunpack.c.l.b16 %v584
    %v596 = vpack.c.b16 %v593, %v592
    %v597 = vpack.c.b16 %v595, %v594
    %v601 = vsel %vm222, %v587, 0
    %603 = vmatprep.subr.bf16.mxu0 0
    %604 = vmatpush1.bf16.msra.mxu0 %v596
    %605 = vmatprep.subr.bf16.mxu0 0
    %606 = vmatpush1.bf16.msra.mxu0 %v597
    %607 = vmatprep.subr.bf16.mxu0 0
    %608 = vmatpush1.bf16.msra.mxu0 0
    %609 = vmatprep.subr.bf16.mxu0 0
    %610 = vmatpush1.bf16.msra.mxu0 0
    %611 = vmatprep.subr.bf16.mxu0 0
    %612 = vmatpush1.bf16.msra.mxu0 0
    %613 = vmatprep.subr.bf16.mxu0 0
    %614 = vmatpush1.bf16.msra.mxu0 0
    %615 = vmatprep.subr.bf16.mxu0 0
    %616 = vmatpush1.bf16.msra.mxu0 0
    %617 = vmatprep.subr.bf16.mxu0 0
    %618 = vmatpush1.bf16.msra.mxu0 0
    %619 = vmatprep.subr.bf16.mxu0 0
    %620 = vmatpush1.bf16.msra.mxu0 0
    %621 = vmatprep.subr.bf16.mxu0 0
    %622 = vmatpush1.bf16.msra.mxu0 0
    %623 = vmatprep.subr.bf16.mxu0 0
    %624 = vmatpush1.bf16.msra.mxu0 0
    %625 = vmatprep.subr.bf16.mxu0 0
    %626 = vmatpush1.bf16.msra.mxu0 0
    %627 = vmatprep.subr.bf16.mxu0 0
    %628 = vmatpush1.bf16.msra.mxu0 0
    %629 = vmatprep.subr.bf16.mxu0 0
    %630 = vmatpush1.bf16.msra.mxu0 0
    %631 = vmatprep.subr.bf16.mxu0 0
    %632 = vmatpush1.bf16.msra.mxu0 0
    %633 = vmatprep.subr.bf16.mxu0 0
    %634 = vmatpush1.bf16.msra.mxu0 0
    %635 = vmatprep.mubr.bf16.mxu0 0
    %636 = vmatmul.mubr.bf16.gmra.mrb[0].mxu0 %v601
    %v637 = vpop.f32.mrb[0].mxu0
    %v638 = vadd.f32 0.0, %v637
    %v639 = vpop.f32.mrb[0].mxu0
    %v640 = vpop.f32.mrb[0].mxu0
    %v641 = vpop.f32.mrb[0].mxu0
    %642 = vdwg.mxu0
    %644 = vrot.lane.b32.xlu0 %v638, 96
    %v645 = vpop.permute.xlu0 %644
    %v647 = vadd.f32 %v198, %v645
    %v648 = vtanh.pop %v647
    %v649 = vsub.f32 1.0, %v573
    %651 = vrot.lane.b32.xlu0 %v648, 64
    %v652 = vpop.permute.xlu0 %651
    %v654 = vmul.f32 %v649, %v652
    %656 = vrot.lane.b32.xlu0 %v507, 96
    %v657 = vpop.permute.xlu0 %656
    %v659 = vmul.f32 %v573, %v657
    %661 = vrot.lane.b32.xlu0 %v659, 32
    %v662 = vpop.permute.xlu0 %661
    %v664 = vadd.f32 %v654, %v662
    %v665 = vld [vmem:[#allocation7] sm:$0x1]
    %v667 = vlaneseq
    %v668 = vshrl.u32 %v667, 7
    %v669 = vsub.s32 0, %v668
    %v670 = vrot.slane %v665, %v669
    %671 = vrot.lane.b32.xlu0 %v670, 32
    %v672 = vpop.permute.xlu0 %671
    %v674 = vmul.f32 %v664, %v672
    %676 = vrot.lane.b32.xlu0 %v674, 96
    %v677 = vpop.permute.xlu0 %676
    %v679 = vsel %vm222, %v677, 0.0
    %680 = vadd.xlane.f32.xlu0 %v679
    %v681 = vpop.xlane.xlu0 %680
    %v682 = vld [vmem:[#allocation2] sm:$0x1]
    %v684 = vlaneseq
    %v685 = vshrl.u32 %v684, 7
    %v686 = vsub.s32 0, %v685
    %v687 = vrot.slane %v682, %v686
    %v689 = vadd.f32 %v681, %v687
    %vm690 = vcmask 7168
    %691 = vst.msk [vmem:[%s7] sm:$0xff] %vm690, %v689
    // Predicated region
    $region42: #{net_dgm_forward.1} parent=1 // pred_check
      _
    $region43: #{net_dgm_forward.1} parent=1 // pred_check_branch
      %693 = sbr.rel (0) target = $region45
    $region44: #{net_dgm_forward.1} parent=1 // pred_region
      _
    $region45: #{net_dgm_forward.1} parent=1 // pred_fallthru
      _
    // Predicated region
    $region46: #{net_dgm_forward.1} parent=1 // pred_check
      _
    $region47: #{net_dgm_forward.1} parent=1 // pred_check_branch
      %695 = sbr.rel (0) target = $region49
    $region48: #{net_dgm_forward.1} parent=1 // pred_region
      _
    $region49: #{net_dgm_forward.1} parent=1 // pred_fallthru
      _
    %696 = vsyncpa [#allocation4], 1
    %697 = vsyncpa [#allocation6], 1

</llo_original>
